<compile_context>
chip_gen: v5e
topology: v5e:2x2
jax: 0.10.0
libtpu: 0.0.40
codegen_flags: <defaults>
</compile_context>

<pallas_src>
import functools
import math

import jax
import jax.numpy as jnp
from jax import lax
from jax.experimental import pallas as pl
from jax.experimental.pallas import tpu as pltpu


def _conv1d_kernel(x_ref, w_ref, b_ref, o_ref, *,
                   kernel_size, c_in, c_out, stride, out_w, batch_block,
                   compute_dtype, fuse_taps):
    """One grid step = `batch_block` batch elements -> one matmul, one store.

    x_ref: (batch_block, stride*C_in, Wt)   stride-phase-folded activations
    w_ref: (C_out, K*C_in)                  columns ordered (k, c_in)
    b_ref: (C_out, 1)
    o_ref: (1, C_out, batch_block*oW)       lanes ordered (b_local, t)
    """
    w2 = w_ref[...].astype(compute_dtype)                  # (C_out, K*C_in)
    bias = b_ref[...].astype(jnp.float32)                  # (C_out, 1) broadcasts over lanes
    # Cast hoisted: one cast for the whole activation block, BEFORE any im2col
    # slicing (no-op when the wrapper already delivered compute_dtype).
    xall = x_ref[...].astype(compute_dtype)                # (b_blk, S*C_in, Wt)

    if fuse_taps:
        # Small C_in: fuse the K taps AND the batch into one operand so the
        # whole grid step is a single MXU matmul with b_blk*oW output lanes.
        cols = []
        for b in range(batch_block):
            x = xall[b]                                    # (S*C_in, Wt)
            taps = []
            for k in range(kernel_size):
                q, r = divmod(k, stride)
                # Contiguous slice: phase-r channel rows, lane window [q, q+oW).
                taps.append(x[r * c_in:(r + 1) * c_in, q:q + out_w])
            cols.append(taps[0] if kernel_size == 1
                        else jnp.concatenate(taps, axis=0))          # (K*C_in, oW)
        xun = cols[0] if batch_block == 1 else jnp.concatenate(cols, axis=1)
        acc = jnp.dot(w2, xun, preferred_element_type=jnp.float32)   # (C_out, b_blk*oW)
    else:
        # Large C_in: each tap already fills the MXU contraction depth, so skip
        # the im2col copy and accumulate K dots per batch element instead.
        outs = []
        for b in range(batch_block):
            x = xall[b]
            acc_b = jnp.zeros((c_out, out_w), jnp.float32)
            for k in range(kernel_size):
                q, r = divmod(k, stride)
                acc_b = acc_b + jnp.dot(
                    w2[:, k * c_in:(k + 1) * c_in],
                    x[r * c_in:(r + 1) * c_in, q:q + out_w],
                    preferred_element_type=jnp.float32)
            outs.append(acc_b)
        acc = outs[0] if batch_block == 1 else jnp.concatenate(outs, axis=1)

    # Single lane-dense store of the whole slab.
    o_ref[0] = (acc + bias).astype(o_ref.dtype)


def conv1d_pallas(x_ncw, weight, bias, stride=1, *,
                  compute_dtype=jnp.bfloat16,
                  fuse_taps=None,
                  target_lanes=512,
                  vmem_budget_bytes=20 * 1024 * 1024):
    """PyTorch Conv1d forward.  x: (B, C_in, W), weight: (C_out, C_in, K), bias: (C_out,)."""
    b, c_in, w_len = x_ncw.shape
    c_out, c_in_w, k = weight.shape
    assert c_in == c_in_w
    assert w_len >= k and stride >= 1
    out_w = (w_len - k) // stride + 1

    if fuse_taps is None:
        # Large C_in already fills the MXU contraction depth per tap -> no im2col copy.
        fuse_taps = c_in < 128

    # ---- stride-phase fold of the activations (identity when stride == 1) ----
    #   xf[b, r*C_in + ci, t] = x[b, ci, stride*t + r]
    if stride == 1:
        xf = x_ncw
        w_t = w_len
    else:
        w_t = pl.cdiv(w_len, stride)
        pad = w_t * stride - w_len
        xp = jnp.pad(x_ncw, ((0, 0), (0, 0), (0, pad)))
        xf = (xp.reshape(b, c_in, w_t, stride)
                .transpose(0, 3, 1, 2)                     # (B, stride, C_in, Wt)
                .reshape(b, stride * c_in, w_t)
                .astype(compute_dtype))                    # fuse the cast into the fold
    rows = xf.shape[1]

    # ---- choose batch_block: lane-dense stores, bounded VMEM, >=2 grid steps when cheap ----
    in_item = jnp.dtype(xf.dtype).itemsize
    cd_item = jnp.dtype(compute_dtype).itemsize
    out_item = jnp.dtype(x_ncw.dtype).itemsize
    per_b = (rows * w_t * in_item * 2                              # input block (double buffered)
             + (k * c_in * out_w * cd_item if fuse_taps else 0)    # in-VMEM im2col copy
             + c_out * out_w * (out_item * 2 + 4))                 # out block (dbuf) + f32 acc
    w_bytes = c_out * k * c_in * cd_item * 2 + c_out * 4 * 2
    budget = max(vmem_budget_bytes - w_bytes, per_b)
    b_blk = min(b, max(1, pl.cdiv(target_lanes, out_w)), max(1, budget // per_b))
    if pl.cdiv(b, b_blk) == 1 and b > 1 and pl.cdiv(b, 2) * out_w >= 128:
        b_blk = pl.cdiv(b, 2)          # give both v7x TensorCores a grid step

    nb = pl.cdiv(b, b_blk)
    b_pad = nb * b_blk
    if b_pad != b:
        xf = jnp.pad(xf, ((0, b_pad - b), (0, 0), (0, 0)))

    # One-time weight/bias relayout: (C_out, C_in, K) -> (C_out, K*C_in) with
    # columns ordered (k, c_in) to match the in-kernel unfold; bias -> (C_out, 1).
    w2 = jnp.transpose(weight, (0, 2, 1)).reshape(c_out, k * c_in).astype(compute_dtype)
    bias2 = bias.reshape(c_out, 1).astype(jnp.float32)

    kernel = functools.partial(
        _conv1d_kernel, kernel_size=k, c_in=c_in, c_out=c_out, stride=stride,
        out_w=out_w, batch_block=b_blk, compute_dtype=compute_dtype,
        fuse_taps=fuse_taps)

    out3 = pl.pallas_call(
        kernel,
        out_shape=jax.ShapeDtypeStruct((nb, c_out, b_blk * out_w), x_ncw.dtype),
        grid_spec=pltpu.PrefetchScalarGridSpec(
            num_scalar_prefetch=0,
            grid=(nb,),
            in_specs=[
                pl.BlockSpec((b_blk, rows, w_t), lambda i: (i, 0, 0)),
                pl.BlockSpec((c_out, k * c_in), lambda i: (0, 0)),
                pl.BlockSpec((c_out, 1), lambda i: (0, 0)),
            ],
            out_specs=pl.BlockSpec((1, c_out, b_blk * out_w), lambda i: (i, 0, 0)),
        ),
        compiler_params=pltpu.CompilerParams(
            dimension_semantics=("parallel",),
            vmem_limit_bytes=64 * 1024 * 1024,
        ),
    )(xf, w2, bias2)

    # Untangle lanes (b_local, t) back to (B, C_out, oW).
    out = (out3.reshape(nb, c_out, b_blk, out_w)
               .transpose(0, 2, 1, 3)
               .reshape(b_pad, c_out, out_w))
    return out[:b] if b_pad != b else out


if __name__ == "__main__":
    # Module config (small, consistent with Conv1d(in, out, kernel_size, stride)).
    in_channels = 4
    out_channels = 8
    kernel_size = 3
    stride = 2
    batch = 2
    width = 16

    key = jax.random.PRNGKey(0)
    kx, kw, kb = jax.random.split(key, 3)

    # Deterministic parameter init matching reset_parameters():
    # uniform(-stdv, stdv), stdv = 1 / sqrt(in_channels * kernel_size)
    stdv = 1.0 / math.sqrt(in_channels * kernel_size)
    weight = jax.random.uniform(
        kw, (out_channels, in_channels, kernel_size),
        minval=-stdv, maxval=stdv, dtype=jnp.float32)
    bias = jax.random.uniform(
        kb, (out_channels,), minval=-stdv, maxval=stdv, dtype=jnp.float32)

    x = jax.random.normal(kx, (batch, in_channels, width), dtype=jnp.float32)

    def reference(x_in, w_in, b_in, s, round_bf16):
        if round_bf16:  # match the kernel's bf16 MXU operands
            x_in = x_in.astype(jnp.bfloat16).astype(jnp.float32)
            w_in = w_in.astype(jnp.bfloat16).astype(jnp.float32)
        ref = lax.conv_general_dilated(
            x_in, w_in, window_strides=(s,), padding="VALID",
            dimension_numbers=("NCH", "OIH", "NCH"),
            precision=lax.Precision.HIGHEST)
        return ref + b_in[None, :, None]

    # 1) Default bf16 compute path: strided and stride==1 (zero-copy fold).
    for s in (stride, 1):
        out = jax.block_until_ready(conv1d_pallas(x, weight, bias, stride=s))
        o_w = (width - kernel_size) // s + 1
        assert out.shape == (batch, out_channels, o_w)
        ref = reference(x, weight, bias, s, round_bf16=True)
        assert jnp.allclose(out, ref, atol=1e-2, rtol=1e-2)

    # 2) Strict f32 parity path (compute_dtype=float32).
    out = jax.block_until_ready(
        conv1d_pallas(x, weight, bias, stride=stride, compute_dtype=jnp.float32))
    ref = reference(x, weight, bias, stride, round_bf16=False)
    assert jnp.allclose(out, ref, atol=1e-5, rtol=1e-5)

    # 3) Force the no-im2col (K accumulated dots) path used for large C_in.
    out = jax.block_until_ready(
        conv1d_pallas(x, weight, bias, stride=stride,
                      compute_dtype=jnp.float32, fuse_taps=False))
    assert jnp.allclose(out, ref, atol=1e-5, rtol=1e-5)

    # 4) Multi-step grid + batch padding path (B=3 with a small lane target
    #    forces batch_block=2 -> nb=2 grid steps, padded trailing block).
    x3 = jax.random.normal(jax.random.PRNGKey(1), (3, in_channels, width), dtype=jnp.float32)
    out = jax.block_until_ready(
        conv1d_pallas(x3, weight, bias, stride=stride,
                      compute_dtype=jnp.float32, target_lanes=14))
    ref3 = reference(x3, weight, bias, stride, round_bf16=False)
    assert out.shape == ref3.shape
    assert jnp.allclose(out, ref3, atol=1e-5, rtol=1e-5)

    print("KERNEL_OK")
</pallas_src>

<mosaic_0001>
module attributes {stable_mosaic.version = 11 : i64} {
  func.func @_conv1d_kernel(%arg0: i32, %arg1: memref<2x8x8xbf16, #tpu.memory_space<vmem>>, %arg2: memref<8x12xbf16, #tpu.memory_space<vmem>>, %arg3: memref<8x1xf32, #tpu.memory_space<vmem>>, %arg4: memref<1x8x14xf32, #tpu.memory_space<vmem>>) attributes {dimension_semantics = [#tpu.dimension_semantics<parallel>], iteration_bounds = array<i64: 1>, scalar_prefetch = 0 : i64, scratch_operands = 0 : i64, tpu.core_type = #tpu.core_type<tc>, window_params = [{transform_indices = @transform_0, window_bounds = array<i64: 2, 8, 8>}, {pipeline_mode = #tpu.pipeline_mode<synchronous>, transform_indices = @transform_1, window_bounds = array<i64: 8, 12>}, {pipeline_mode = #tpu.pipeline_mode<synchronous>, transform_indices = @transform_2, window_bounds = array<i64: 8, 1>}, {transform_indices = @transform_3, window_bounds = array<i64: 1, 8, 14>}]} {
    %c0 = arith.constant 0 : index
    %c0_0 = arith.constant 0 : index
    %0 = vector.load %arg2[%c0, %c0_0] : memref<8x12xbf16, #tpu.memory_space<vmem>>, vector<8x12xbf16>
    %c0_1 = arith.constant 0 : index
    %c0_2 = arith.constant 0 : index
    %1 = vector.load %arg3[%c0_1, %c0_2] : memref<8x1xf32, #tpu.memory_space<vmem>>, vector<8x1xf32>
    %c0_3 = arith.constant 0 : index
    %c0_4 = arith.constant 0 : index
    %c0_5 = arith.constant 0 : index
    %2 = vector.load %arg1[%c0_3, %c0_4, %c0_5] : memref<2x8x8xbf16, #tpu.memory_space<vmem>>, vector<2x8x8xbf16>
    %3 = vector.extract_strided_slice %2 {offsets = [0, 0, 0], sizes = [1, 8, 8], strides = [1, 1, 1]} : vector<2x8x8xbf16> to vector<1x8x8xbf16>
    %4 = vector.shape_cast %3 : vector<1x8x8xbf16> to vector<8x8xbf16>
    %5 = vector.extract_strided_slice %4 {offsets = [0, 0], sizes = [4, 7], strides = [1, 1]} : vector<8x8xbf16> to vector<4x7xbf16>
    %6 = vector.extract_strided_slice %4 {offsets = [4, 0], sizes = [4, 7], strides = [1, 1]} : vector<8x8xbf16> to vector<4x7xbf16>
    %7 = vector.extract_strided_slice %4 {offsets = [0, 1], sizes = [4, 7], strides = [1, 1]} : vector<8x8xbf16> to vector<4x7xbf16>
    %8 = tpu.concatenate %5, %6, %7 in 0 : vector<4x7xbf16>, vector<4x7xbf16>, vector<4x7xbf16> -> vector<12x7xbf16>
    %9 = vector.extract_strided_slice %2 {offsets = [1, 0, 0], sizes = [1, 8, 8], strides = [1, 1, 1]} : vector<2x8x8xbf16> to vector<1x8x8xbf16>
    %10 = vector.shape_cast %9 : vector<1x8x8xbf16> to vector<8x8xbf16>
    %11 = vector.extract_strided_slice %10 {offsets = [0, 0], sizes = [4, 7], strides = [1, 1]} : vector<8x8xbf16> to vector<4x7xbf16>
    %12 = vector.extract_strided_slice %10 {offsets = [4, 0], sizes = [4, 7], strides = [1, 1]} : vector<8x8xbf16> to vector<4x7xbf16>
    %13 = vector.extract_strided_slice %10 {offsets = [0, 1], sizes = [4, 7], strides = [1, 1]} : vector<8x8xbf16> to vector<4x7xbf16>
    %14 = tpu.concatenate %11, %12, %13 in 0 : vector<4x7xbf16>, vector<4x7xbf16>, vector<4x7xbf16> -> vector<12x7xbf16>
    %15 = tpu.concatenate %8, %14 in 1 : vector<12x7xbf16>, vector<12x7xbf16> -> vector<12x14xbf16>
    %cst = arith.constant dense<0.000000e+00> : vector<8x14xf32>
    %16 = tpu.matmul %0, %15, %cst {dimension_numbers = #tpu.dot_dimension_numbers<[1], [0], [0], [1], [0, 0, 1, 1], [], []>} : vector<8x12xbf16>, vector<12x14xbf16>, vector<8x14xf32> -> vector<8x14xf32>
    %17 = vector.broadcast %1 : vector<8x1xf32> to vector<8x14xf32>
    %18 = arith.addf %16, %17 : vector<8x14xf32>
    %c0_6 = arith.constant 0 : index
    %c0_7 = arith.constant 0 : index
    %c0_8 = arith.constant 0 : index
    %19 = vector.load %arg4[%c0_6, %c0_7, %c0_8] : memref<1x8x14xf32, #tpu.memory_space<vmem>>, vector<1x8x14xf32>
    %20 = vector.shape_cast %19 : vector<1x8x14xf32> to vector<8x14xf32>
    %21 = vector.shape_cast %18 : vector<8x14xf32> to vector<1x8x14xf32>
    tpu.vector_store %arg4[%c0_6, %c0_7, %c0_8], %21 {strides = array<i32>} : memref<1x8x14xf32, #tpu.memory_space<vmem>>, vector<1x8x14xf32>,
    return
  }
  func.func @transform_0(%arg0: i32) -> (i32, i32, i32) {
    %c0_i32 = arith.constant 0 : i32
    %c0_i32_0 = arith.constant 0 : i32
    %c0_i32_1 = arith.constant 0 : i32
    return %arg0, %c0_i32, %c0_i32_0 : i32, i32, i32
  }
  func.func @transform_1(%arg0: i32) -> (i32, i32) {
    %c0_i32 = arith.constant 0 : i32
    %c0_i32_0 = arith.constant 0 : i32
    %c0_i32_1 = arith.constant 0 : i32
    return %c0_i32, %c0_i32_0 : i32, i32
  }
  func.func @transform_2(%arg0: i32) -> (i32, i32) {
    %c0_i32 = arith.constant 0 : i32
    %c0_i32_0 = arith.constant 0 : i32
    %c0_i32_1 = arith.constant 0 : i32
    return %c0_i32, %c0_i32_0 : i32, i32
  }
  func.func @transform_3(%arg0: i32) -> (i32, i32, i32) {
    %c0_i32 = arith.constant 0 : i32
    %c0_i32_0 = arith.constant 0 : i32
    %c0_i32_1 = arith.constant 0 : i32
    return %arg0, %c0_i32, %c0_i32_0 : i32, i32, i32
  }
}

</mosaic_0001>

<llo_original>
// kernel: tpu_custom_call.1
$region0: #{tpu_custom_call.1}
  #allocation0 [shape = 'u32[]', space=smem, size = 0x4, offset = 0x4, fixed_abs, tag = 'smem constant byte address 0x4 - core index']
  #allocation1 [shape = 'u32[72,128]{1,0:T(1,128)}', space=vmem, size = 0x9000, scoped, tag = 'internal scratch']
  %s0 = inlined_call_operand.vmem [shape: bf16[2,8,8], index: 0, kind: input, shape index: {}]
  %s1 = inlined_call_operand.hbm [shape: bf16[8,12], index: 1, kind: input, shape index: {}]
  %s2 = inlined_call_operand.vmem [shape: f32[8,1], index: 2, kind: input, shape index: {}]
  %s3 = inlined_call_operand.hbm [shape: f32[1,8,14], index: 3, kind: output, shape index: {}]
  %s4 = sld [smem:[#allocation0]]
  $region26: #{tpu_custom_call.1} parent=0
    _
  %s6 = ssub.s32 1, %s4
  %s7 = scalar_select 0, %s6, %s4
  $region1: #{tpu_custom_call.1} parent=0
    #allocation2 [shape = 'u8[2048]{0}', space=vmem, size = 0x800, scoped, tag = 'input window, operand 1, single buffered']
    #allocation3 [shape = 's32[1]{0}', space=sflag, size = 0x4, scoped, tag = 'scoped memory for tpu_custom_call.1']
    #allocation4 [shape = 's32[1]{0}', space=sflag, size = 0x4, scoped, tag = 'scoped memory for tpu_custom_call.1']
    #allocation5 [shape = 'u8[4096]{0}', space=vmem, size = 0x1000, scoped, tag = 'output window, operand 0, single buffered']
    %8 = vsyncpa [#allocation3], 0
    %9 = vsyncpa [#allocation4], 0
    // Predicated region
    $region2: #{tpu_custom_call.1} parent=1 // pred_check
      _
    $region3: #{tpu_custom_call.1} parent=1 // pred_check_branch
      %11 = sbr.rel (0) target = $region5
    $region4: #{tpu_custom_call.1} parent=1 // pred_region
      _
    $region5: #{tpu_custom_call.1} parent=1 // pred_fallthru
      _
    // Predicated region
    $region6: #{tpu_custom_call.1} parent=1 // pred_check
      _
    $region7: #{tpu_custom_call.1} parent=1 // pred_check_branch
      %13 = sbr.rel (0) target = $region9
    $region8: #{tpu_custom_call.1} parent=1 // pred_region
      %15 = vsyncadd [#allocation3], 0
      %s17 = sshll.u32 %s1, 4
      %s18 = int_to_ptr.hbm [resolvable:$true] %s17
      %s19 = sshll.u32 [#allocation2], 4
      %s20 = int_to_ptr.vmem [resolvable:$true] %s19
      %22 = dma.hbm_to_vmem [thread:$0]  %s18, 64, %s20, [#allocation3]
    $region9: #{tpu_custom_call.1} parent=1 // pred_fallthru
      _
    // Predicated region
    $region10: #{tpu_custom_call.1} parent=1 // pred_check
      _
    $region11: #{tpu_custom_call.1} parent=1 // pred_check_branch
      %24 = sbr.rel (0) target = $region13
    $region12: #{tpu_custom_call.1} parent=1 // pred_region
      _
    $region13: #{tpu_custom_call.1} parent=1 // pred_fallthru
      _
    // Predicated region
    $region14: #{tpu_custom_call.1} parent=1 // pred_check
      _
    $region15: #{tpu_custom_call.1} parent=1 // pred_check_branch
      %26 = sbr.rel (0) target = $region17
    $region16: #{tpu_custom_call.1} parent=1 // pred_region
      %28 = dma.done [#allocation3], 64
    $region17: #{tpu_custom_call.1} parent=1 // pred_fallthru
      _
    %v30 = vld [vmem:[#allocation2] sm:$0xf]
    %v31 = vld [vmem:[%s2] sm:$0xff]
    %v32 = vld [vmem:[%s0] sm:$0xf]
    %v33 = vld [vmem:[%s0 + $0x4] sm:$0xf]
    %v35 = vunpack.c.l.b16 %v32
    %v36 = vpack.c.b16 %v35, %v35
    %37 = vrot.lane.b32.xlu0 %v36, 127
    %v38 = vpop.permute.xlu0 %37
    %vm40 = vcmask 1043456
    %v42 = vsel %vm40, %v32, %v38
    %v44 = vunpack.c.l.b16 %v33
    %v45 = vpack.c.b16 %v44, %v44
    %46 = vrot.lane.b32.xlu0 %v45, 127
    %v47 = vpop.permute.xlu0 %46
    %v50 = vsel %vm40, %v33, %v47
    %52 = vrot.lane.b32.xlu0 %v50, 7
    %v53 = vpop.permute.xlu0 %52
    %vm54 = vcmask 56320
    %v56 = vsel %vm54, %v42, %v53
    %58 = vset.pattern.permute.xlu0 0
    %59 = vperm.xlu0 %58, %v31
    %v60 = vpop.permute.xlu0 %59
    %vm62 = vcmask 97280
    %v64 = vsel %vm62, %v30, 0
    %vm66 = vcmask 1045504
    %v67 = vsel %vm66, %v56, 0
    %69 = vmatpush.bf16.msra.mxu0 0
    %70 = vmatpush.bf16.msra.mxu0 0
    %71 = vmatpush.bf16.msra.mxu0 0
    %72 = vmatpush.bf16.msra.mxu0 0
    %73 = vmatpush.bf16.msra.mxu0 0
    %74 = vmatpush.bf16.msra.mxu0 0
    %75 = vmatpush.bf16.msra.mxu0 0
    %76 = vmatpush.bf16.msra.mxu0 %v67
    %77 = vmatmul.bf16.gmra.mxu0 %v64
    %v78 = vpop.f32.mrf.mxu0
    %v79 = vadd.f32 %v60, %v78
    %v80 = vpop.f32.mrf.mxu0
    %81 = vdwg.mxu0
    %vm82 = vcmask 113664
    %83 = vst.msk [vmem:[#allocation5] sm:$0xff] %vm82, %v79
    // Predicated region
    $region18: #{tpu_custom_call.1} parent=1 // pred_check
      _
    $region19: #{tpu_custom_call.1} parent=1 // pred_check_branch
      %85 = sbr.rel (0) target = $region21
    $region20: #{tpu_custom_call.1} parent=1 // pred_region
      %87 = vsyncadd [#allocation4], 0
      %s89 = sshll.u32 [#allocation5], 4
      %s90 = int_to_ptr.vmem [resolvable:$true] %s89
      %s91 = sshll.u32 %s3, 4
      %s92 = int_to_ptr.hbm [resolvable:$true] %s91
      %94 = dma.vmem_to_hbm [thread:$0]  %s90, 128, %s92, [#allocation4]
    $region21: #{tpu_custom_call.1} parent=1 // pred_fallthru
      _
    // Predicated region
    $region22: #{tpu_custom_call.1} parent=1 // pred_check
      _
    $region23: #{tpu_custom_call.1} parent=1 // pred_check_branch
      %96 = sbr.rel (0) target = $region25
    $region24: #{tpu_custom_call.1} parent=1 // pred_region
      %98 = dma.done [#allocation4], 128
    $region25: #{tpu_custom_call.1} parent=1 // pred_fallthru
      _
    %99 = vsyncpa [#allocation3], 1
    %100 = vsyncpa [#allocation4], 1

</llo_original>
